<compile_context>
chip_gen: v5e
topology: v5e:2x2
jax: 0.10.0
libtpu: 0.0.40
codegen_flags: <defaults>
</compile_context>

<pallas_src>
import jax
import jax.numpy as jnp
from jax import lax
from jax.experimental import pallas as pl
from jax.experimental.pallas import tpu as pltpu

# ----- static module / problem configuration --------------------------------
B, C, T = 2, 32, 64        # B*T = 128  -> exactly one full lane dimension
SCALE = 4
W = C // SCALE             # per-branch width
NUMS = SCALE - 1           # number of conv branches (scale != 1)
K = 3                      # conv kernel size
DIL = 1                    # dilation
PAD = DIL * (K - 1) // 2   # "same" padding so branch outputs keep length T
EPS = 1e-5                 # BatchNorm1d default eps
BT = B * T                 # lanes after the in-kernel fold
KW = K * W                 # stacked contraction dim for the per-branch matmul


# ----- Pallas kernel ----------------------------------------------------------
def res2conv_kernel(x_ref, w_ref, g_ref, b_ref, o_ref):
    # x_ref : (B, C, T)        input, native NCL layout (no wrapper transpose)
    # w_ref : (NUMS, W, K*W)   conv weights, lane-dense: [branch, out_ch, k*W + in_ch]
    # g_ref : (NUMS, W, 1)     BN gamma
    # b_ref : (NUMS, W, 1)     BN beta
    # o_ref : (B, C, T)        output, native NCL layout
    inv_cnt = 1.0 / float(BT)

    # Fold to lane-dense (C, B*T): one lane concat of the B batch slabs, done once.
    x2d = jnp.concatenate([x_ref[b] for b in range(B)], axis=1)          # (C, BT)

    # Tap shifts and their edge-validity masks, hoisted out of the branch loop.
    # Lane index is b*T + t; masking t+sh outside [0, T) also kills cross-batch wrap.
    t_idx = lax.broadcasted_iota(jnp.int32, (W, BT), 1) % T
    shifts = [k * DIL - PAD for k in range(K)]
    masks = {sh: (t_idx + sh >= 0) & (t_idx + sh < T) for sh in shifts if sh != 0}

    sp = x2d[0:W, :]                                                     # (W, BT) register-resident carry
    for i in range(NUMS):
        if i > 0:
            sp = sp + x2d[i * W:(i + 1) * W, :]                          # residual carry: sp + spx[i]

        # K shifted/masked conv taps (XLU rolls), stacked into one (K*W, BT) block.
        taps = []
        for sh in shifts:
            if sh == 0:
                taps.append(sp)
            else:
                rolled = pltpu.roll(sp, shift=(-sh) % BT, axis=1)        # rolled[:, l] = sp[:, l+sh]
                taps.append(jnp.where(masks[sh], rolled, 0.0))
        stacked = jnp.concatenate(taps, axis=0)                          # (K*W, BT)

        # Conv1d (no bias) as a single (W, K*W) @ (K*W, BT) MXU matmul.
        conv = jnp.dot(w_ref[i], stacked,
                       preferred_element_type=jnp.float32)               # (W, BT)

        r = jnp.maximum(conv, 0.0)                                       # ReLU before BN

        # BatchNorm1d, training mode: biased batch stats over all B*T lanes per channel.
        # Single pass (sum + sum-of-squares), affine fused at (W, 1) width.
        s1 = jnp.sum(r, axis=1, keepdims=True)                           # (W, 1)
        s2 = jnp.sum(r * r, axis=1, keepdims=True)                       # (W, 1)
        mean = s1 * inv_cnt
        var = jnp.maximum(s2 * inv_cnt - mean * mean, 0.0)
        scale = g_ref[i] * lax.rsqrt(var + EPS)                          # (W, 1)
        shift = b_ref[i] - mean * scale                                  # (W, 1)
        y = r * scale + shift                                            # (W, BT)

        # Write back directly in NCL layout: one (W, T) store per batch.
        for b in range(B):
            o_ref[b, i * W:(i + 1) * W, :] = y[:, b * T:(b + 1) * T]

        sp = y                                                           # carry BN output forward

    # Last sub-band is passed through untouched (scale != 1 branch).
    o_ref[:, NUMS * W:, :] = x_ref[:, NUMS * W:, :]


# ----- wrapper ---------------------------------------------------------------
@jax.jit
def res2conv1d_relu_bn(x, conv_w, bn_gamma, bn_beta):
    """x: (B, C, T) f32; conv_w: (NUMS, W_out, W_in, K) (PyTorch layout); bn_*: (NUMS, W)."""
    # Lane-dense weight matrix: w_mat[n, o, k*W + i] = conv_w[n, o, i, k] (tiny one-time prep;
    # the activation tensor itself goes into the kernel untouched, in NCL layout).
    w_mat = jnp.transpose(conv_w, (0, 1, 3, 2)).reshape(NUMS, W, KW).astype(jnp.float32)
    g3 = bn_gamma.reshape(NUMS, W, 1).astype(jnp.float32)
    b3 = bn_beta.reshape(NUMS, W, 1).astype(jnp.float32)

    return pl.pallas_call(
        res2conv_kernel,
        out_shape=jax.ShapeDtypeStruct((B, C, T), jnp.float32),
        in_specs=[pl.BlockSpec(memory_space=pltpu.MemorySpace.VMEM)] * 4,
        out_specs=pl.BlockSpec(memory_space=pltpu.MemorySpace.VMEM),
    )(x.astype(jnp.float32), w_mat, g3, b3)


# ----- pure-JAX reference (mirrors the PyTorch forward, exact f32) ------------
def reference(x, conv_w, bn_gamma, bn_beta):
    outs = []
    sp = None
    for i in range(NUMS):
        chunk = x[:, i * W:(i + 1) * W, :]
        sp = chunk if i == 0 else sp + chunk
        spp = jnp.pad(sp, ((0, 0), (0, 0), (PAD, PAD)))
        acc = jnp.zeros((B, W, T), jnp.float32)
        for k in range(K):
            acc = acc + jnp.einsum('ow,bwt->bot', conv_w[i, :, :, k],
                                   spp[:, :, k * DIL:k * DIL + T],
                                   precision=lax.Precision.HIGHEST)
        r = jnp.maximum(acc, 0.0)
        mean = jnp.mean(r, axis=(0, 2), keepdims=True)
        var = jnp.mean(jnp.square(r - mean), axis=(0, 2), keepdims=True)
        y = ((r - mean) * lax.rsqrt(var + EPS)
             * bn_gamma[i][None, :, None] + bn_beta[i][None, :, None])
        outs.append(y)
        sp = y
    outs.append(x[:, NUMS * W:, :])
    return jnp.concatenate(outs, axis=1)


# ----- main ------------------------------------------------------------------
if __name__ == "__main__":
    key = jax.random.PRNGKey(0)
    kx, kw, kg, kb = jax.random.split(key, 4)

    x = jax.random.normal(kx, (B, C, T), dtype=jnp.float32)
    conv_w = 0.2 * jax.random.normal(kw, (NUMS, W, W, K), dtype=jnp.float32)
    bn_gamma = 1.0 + 0.1 * jax.random.normal(kg, (NUMS, W), dtype=jnp.float32)
    bn_beta = 0.1 * jax.random.normal(kb, (NUMS, W), dtype=jnp.float32)

    out = jax.block_until_ready(res2conv1d_relu_bn(x, conv_w, bn_gamma, bn_beta))
    ref = jax.block_until_ready(reference(x, conv_w, bn_gamma, bn_beta))

    assert out.shape == (B, C, T) and out.dtype == jnp.float32
    # Tolerance accounts for the MXU bf16-emulated f32 conv passes and the
    # single-pass BN variance (reference uses HIGHEST-precision einsum + centered var).
    assert bool(jnp.allclose(out, ref, rtol=5e-3, atol=5e-3)), "mismatch vs reference"

    print("KERNEL_OK")
</pallas_src>

<mosaic_0001>
module attributes {stable_mosaic.version = 11 : i64} {
  func.func @res2conv_kernel(%arg0: memref<2x32x64xf32, #tpu.memory_space<vmem>>, %arg1: memref<3x8x24xf32, #tpu.memory_space<vmem>>, %arg2: memref<3x8x1xf32, #tpu.memory_space<vmem>>, %arg3: memref<3x8x1xf32, #tpu.memory_space<vmem>>, %arg4: memref<2x32x64xf32, #tpu.memory_space<vmem>>) attributes {dimension_semantics = [], scalar_prefetch = 0 : i64, scratch_operands = 0 : i64, tpu.core_type = #tpu.core_type<tc>} {
    %c0 = arith.constant 0 : index
    %c0_0 = arith.constant 0 : index
    %c0_1 = arith.constant 0 : index
    %0 = vector.load %arg0[%c0, %c0_0, %c0_1] : memref<2x32x64xf32, #tpu.memory_space<vmem>>, vector<1x32x64xf32>
    %1 = vector.shape_cast %0 : vector<1x32x64xf32> to vector<32x64xf32>
    %c1 = arith.constant 1 : index
    %c0_2 = arith.constant 0 : index
    %c0_3 = arith.constant 0 : index
    %2 = vector.load %arg0[%c1, %c0_2, %c0_3] : memref<2x32x64xf32, #tpu.memory_space<vmem>>, vector<1x32x64xf32>
    %3 = vector.shape_cast %2 : vector<1x32x64xf32> to vector<32x64xf32>
    %4 = tpu.concatenate %1, %3 in 1 : vector<32x64xf32>, vector<32x64xf32> -> vector<32x128xf32>
    %5 = tpu.iota {dimensions = array<i32: 1>} : vector<8x128xi32>
    %c64_i32 = arith.constant 64 : i32
    %c0_i32 = arith.constant 0 : i32
    %6 = arith.cmpi eq, %c64_i32, %c0_i32 : i32
    %c1_i32 = arith.constant 1 : i32
    %7 = arith.select %6, %c1_i32, %c64_i32 : i32
    %8 = vector.broadcast %7 : i32 to vector<8x128xi32>
    %9 = arith.remsi %5, %8 : vector<8x128xi32>
    %c0_i32_4 = arith.constant 0 : i32
    %10 = vector.broadcast %c0_i32_4 : i32 to vector<8x128xi32>
    %11 = arith.cmpi ne, %9, %10 : vector<8x128xi32>
    %c0_i32_5 = arith.constant 0 : i32
    %12 = vector.broadcast %c0_i32_5 : i32 to vector<8x128xi32>
    %13 = arith.cmpi slt, %9, %12 : vector<8x128xi32>
    %c0_i32_6 = arith.constant 0 : i32
    %14 = arith.cmpi slt, %7, %c0_i32_6 : i32
    %15 = vector.broadcast %14 : i1 to vector<8x128xi1>
    %16 = vector.broadcast %15 : vector<8x128xi1> to vector<8x128xi1>
    %17 = arith.xori %13, %16 : vector<8x128xi1>
    %18 = arith.andi %17, %11 : vector<8x128xi1>
    %19 = vector.broadcast %7 : i32 to vector<8x128xi32>
    %20 = arith.addi %9, %19 : vector<8x128xi32>
    %21 = arith.select %18, %20, %9 : vector<8x128xi1>, vector<8x128xi32>
    %c-1_i32 = arith.constant -1 : i32
    %22 = vector.broadcast %c-1_i32 : i32 to vector<8x128xi32>
    %23 = arith.addi %21, %22 : vector<8x128xi32>
    %c0_i32_7 = arith.constant 0 : i32
    %24 = vector.broadcast %c0_i32_7 : i32 to vector<8x128xi32>
    %25 = arith.cmpi sge, %23, %24 : vector<8x128xi32>
    %c-1_i32_8 = arith.constant -1 : i32
    %26 = vector.broadcast %c-1_i32_8 : i32 to vector<8x128xi32>
    %27 = arith.addi %21, %26 : vector<8x128xi32>
    %c64_i32_9 = arith.constant 64 : i32
    %28 = vector.broadcast %c64_i32_9 : i32 to vector<8x128xi32>
    %29 = arith.cmpi slt, %27, %28 : vector<8x128xi32>
    %30 = arith.andi %25, %29 : vector<8x128xi1>
    %c1_i32_10 = arith.constant 1 : i32
    %31 = vector.broadcast %c1_i32_10 : i32 to vector<8x128xi32>
    %32 = arith.addi %21, %31 : vector<8x128xi32>
    %c0_i32_11 = arith.constant 0 : i32
    %33 = vector.broadcast %c0_i32_11 : i32 to vector<8x128xi32>
    %34 = arith.cmpi sge, %32, %33 : vector<8x128xi32>
    %c1_i32_12 = arith.constant 1 : i32
    %35 = vector.broadcast %c1_i32_12 : i32 to vector<8x128xi32>
    %36 = arith.addi %21, %35 : vector<8x128xi32>
    %c64_i32_13 = arith.constant 64 : i32
    %37 = vector.broadcast %c64_i32_13 : i32 to vector<8x128xi32>
    %38 = arith.cmpi slt, %36, %37 : vector<8x128xi32>
    %39 = arith.andi %34, %38 : vector<8x128xi1>
    %40 = vector.extract_strided_slice %4 {offsets = [0, 0], sizes = [8, 128], strides = [1, 1]} : vector<32x128xf32> to vector<8x128xf32>
    %c1_i32_14 = arith.constant 1 : i32
    %41 = tpu.dynamic_rotate %40 by %c1_i32_14 dim 1 : vector<8x128xf32>, i32 -> vector<8x128xf32>
    %cst = arith.constant 0.000000e+00 : f32
    %42 = vector.broadcast %cst : f32 to vector<8x128xf32>
    %43 = arith.select %30, %41, %42 : vector<8x128xi1>, vector<8x128xf32>
    %c127_i32 = arith.constant 127 : i32
    %44 = tpu.dynamic_rotate %40 by %c127_i32 dim 1 : vector<8x128xf32>, i32 -> vector<8x128xf32>
    %cst_15 = arith.constant 0.000000e+00 : f32
    %45 = vector.broadcast %cst_15 : f32 to vector<8x128xf32>
    %46 = arith.select %39, %44, %45 : vector<8x128xi1>, vector<8x128xf32>
    %47 = tpu.concatenate %43, %40, %46 in 0 : vector<8x128xf32>, vector<8x128xf32>, vector<8x128xf32> -> vector<24x128xf32>
    %c0_16 = arith.constant 0 : index
    %c0_17 = arith.constant 0 : index
    %c0_18 = arith.constant 0 : index
    %48 = vector.load %arg1[%c0_16, %c0_17, %c0_18] : memref<3x8x24xf32, #tpu.memory_space<vmem>>, vector<1x8x24xf32>
    %49 = vector.shape_cast %48 : vector<1x8x24xf32> to vector<8x24xf32>
    %cst_19 = arith.constant dense<0.000000e+00> : vector<8x128xf32>
    %50 = tpu.matmul %49, %47, %cst_19 {dimension_numbers = #tpu.dot_dimension_numbers<[1], [0], [0], [1], [0, 0, 1, 1], [], []>} : vector<8x24xf32>, vector<24x128xf32>, vector<8x128xf32> -> vector<8x128xf32>
    %cst_20 = arith.constant 0.000000e+00 : f32
    %51 = vector.broadcast %cst_20 : f32 to vector<8x128xf32>
    %52 = arith.maximumf %50, %51 : vector<8x128xf32>
    %cst_21 = arith.constant dense<0.000000e+00> : vector<8xf32>
    %53 = vector.multi_reduction <add>, %52, %cst_21 [1] : vector<8x128xf32> to vector<8xf32>
    %54 = vector.shape_cast %53 : vector<8xf32> to vector<8x1xf32>
    %55 = arith.mulf %52, %52 : vector<8x128xf32>
    %cst_22 = arith.constant dense<0.000000e+00> : vector<8xf32>
    %56 = vector.multi_reduction <add>, %55, %cst_22 [1] : vector<8x128xf32> to vector<8xf32>
    %57 = vector.shape_cast %56 : vector<8xf32> to vector<8x1xf32>
    %cst_23 = arith.constant 7.812500e-03 : f32
    %58 = vector.broadcast %cst_23 : f32 to vector<8x1xf32>
    %59 = arith.mulf %54, %58 : vector<8x1xf32>
    %cst_24 = arith.constant 7.812500e-03 : f32
    %60 = vector.broadcast %cst_24 : f32 to vector<8x1xf32>
    %61 = arith.mulf %57, %60 : vector<8x1xf32>
    %62 = arith.mulf %59, %59 : vector<8x1xf32>
    %63 = arith.subf %61, %62 : vector<8x1xf32>
    %cst_25 = arith.constant 0.000000e+00 : f32
    %64 = vector.broadcast %cst_25 : f32 to vector<8x1xf32>
    %65 = arith.maximumf %63, %64 : vector<8x1xf32>
    %c0_26 = arith.constant 0 : index
    %c0_27 = arith.constant 0 : index
    %c0_28 = arith.constant 0 : index
    %66 = vector.load %arg2[%c0_26, %c0_27, %c0_28] : memref<3x8x1xf32, #tpu.memory_space<vmem>>, vector<1x8x1xf32>
    %67 = vector.shape_cast %66 : vector<1x8x1xf32> to vector<8x1xf32>
    %cst_29 = arith.constant 9.99999974E-6 : f32
    %68 = vector.broadcast %cst_29 : f32 to vector<8x1xf32>
    %69 = arith.addf %65, %68 : vector<8x1xf32>
    %70 = math.rsqrt %69 : vector<8x1xf32>
    %71 = arith.mulf %67, %70 : vector<8x1xf32>
    %c0_30 = arith.constant 0 : index
    %c0_31 = arith.constant 0 : index
    %c0_32 = arith.constant 0 : index
    %72 = vector.load %arg3[%c0_30, %c0_31, %c0_32] : memref<3x8x1xf32, #tpu.memory_space<vmem>>, vector<1x8x1xf32>
    %73 = vector.shape_cast %72 : vector<1x8x1xf32> to vector<8x1xf32>
    %74 = arith.mulf %59, %71 : vector<8x1xf32>
    %75 = arith.subf %73, %74 : vector<8x1xf32>
    %76 = vector.broadcast %71 : vector<8x1xf32> to vector<8x128xf32>
    %77 = arith.mulf %52, %76 : vector<8x128xf32>
    %78 = vector.broadcast %75 : vector<8x1xf32> to vector<8x128xf32>
    %79 = arith.addf %77, %78 : vector<8x128xf32>
    %80 = vector.extract_strided_slice %79 {offsets = [0, 0], sizes = [8, 64], strides = [1, 1]} : vector<8x128xf32> to vector<8x64xf32>
    %c0_33 = arith.constant 0 : index
    %c0_34 = arith.constant 0 : index
    %c0_35 = arith.constant 0 : index
    %81 = vector.load %arg4[%c0_33, %c0_34, %c0_35] : memref<2x32x64xf32, #tpu.memory_space<vmem>>, vector<1x8x64xf32>
    %82 = vector.shape_cast %81 : vector<1x8x64xf32> to vector<8x64xf32>
    %83 = vector.shape_cast %80 : vector<8x64xf32> to vector<1x8x64xf32>
    tpu.vector_store %arg4[%c0_33, %c0_34, %c0_35], %83 {strides = array<i32>} : memref<2x32x64xf32, #tpu.memory_space<vmem>>, vector<1x8x64xf32>,
    %84 = vector.extract_strided_slice %79 {offsets = [0, 64], sizes = [8, 64], strides = [1, 1]} : vector<8x128xf32> to vector<8x64xf32>
    %c1_36 = arith.constant 1 : index
    %c0_37 = arith.constant 0 : index
    %c0_38 = arith.constant 0 : index
    %85 = vector.load %arg4[%c1_36, %c0_37, %c0_38] : memref<2x32x64xf32, #tpu.memory_space<vmem>>, vector<1x8x64xf32>
    %86 = vector.shape_cast %85 : vector<1x8x64xf32> to vector<8x64xf32>
    %87 = vector.shape_cast %84 : vector<8x64xf32> to vector<1x8x64xf32>
    tpu.vector_store %arg4[%c1_36, %c0_37, %c0_38], %87 {strides = array<i32>} : memref<2x32x64xf32, #tpu.memory_space<vmem>>, vector<1x8x64xf32>,
    %88 = vector.extract_strided_slice %4 {offsets = [8, 0], sizes = [8, 128], strides = [1, 1]} : vector<32x128xf32> to vector<8x128xf32>
    %89 = arith.addf %79, %88 : vector<8x128xf32>
    %c1_i32_39 = arith.constant 1 : i32
    %90 = tpu.dynamic_rotate %89 by %c1_i32_39 dim 1 : vector<8x128xf32>, i32 -> vector<8x128xf32>
    %cst_40 = arith.constant 0.000000e+00 : f32
    %91 = vector.broadcast %cst_40 : f32 to vector<8x128xf32>
    %92 = arith.select %30, %90, %91 : vector<8x128xi1>, vector<8x128xf32>
    %c127_i32_41 = arith.constant 127 : i32
    %93 = tpu.dynamic_rotate %89 by %c127_i32_41 dim 1 : vector<8x128xf32>, i32 -> vector<8x128xf32>
    %cst_42 = arith.constant 0.000000e+00 : f32
    %94 = vector.broadcast %cst_42 : f32 to vector<8x128xf32>
    %95 = arith.select %39, %93, %94 : vector<8x128xi1>, vector<8x128xf32>
    %96 = tpu.concatenate %92, %89, %95 in 0 : vector<8x128xf32>, vector<8x128xf32>, vector<8x128xf32> -> vector<24x128xf32>
    %c1_43 = arith.constant 1 : index
    %c0_44 = arith.constant 0 : index
    %c0_45 = arith.constant 0 : index
    %97 = vector.load %arg1[%c1_43, %c0_44, %c0_45] : memref<3x8x24xf32, #tpu.memory_space<vmem>>, vector<1x8x24xf32>
    %98 = vector.shape_cast %97 : vector<1x8x24xf32> to vector<8x24xf32>
    %cst_46 = arith.constant dense<0.000000e+00> : vector<8x128xf32>
    %99 = tpu.matmul %98, %96, %cst_46 {dimension_numbers = #tpu.dot_dimension_numbers<[1], [0], [0], [1], [0, 0, 1, 1], [], []>} : vector<8x24xf32>, vector<24x128xf32>, vector<8x128xf32> -> vector<8x128xf32>
    %cst_47 = arith.constant 0.000000e+00 : f32
    %100 = vector.broadcast %cst_47 : f32 to vector<8x128xf32>
    %101 = arith.maximumf %99, %100 : vector<8x128xf32>
    %cst_48 = arith.constant dense<0.000000e+00> : vector<8xf32>
    %102 = vector.multi_reduction <add>, %101, %cst_48 [1] : vector<8x128xf32> to vector<8xf32>
    %103 = vector.shape_cast %102 : vector<8xf32> to vector<8x1xf32>
    %104 = arith.mulf %101, %101 : vector<8x128xf32>
    %cst_49 = arith.constant dense<0.000000e+00> : vector<8xf32>
    %105 = vector.multi_reduction <add>, %104, %cst_49 [1] : vector<8x128xf32> to vector<8xf32>
    %106 = vector.shape_cast %105 : vector<8xf32> to vector<8x1xf32>
    %cst_50 = arith.constant 7.812500e-03 : f32
    %107 = vector.broadcast %cst_50 : f32 to vector<8x1xf32>
    %108 = arith.mulf %103, %107 : vector<8x1xf32>
    %cst_51 = arith.constant 7.812500e-03 : f32
    %109 = vector.broadcast %cst_51 : f32 to vector<8x1xf32>
    %110 = arith.mulf %106, %109 : vector<8x1xf32>
    %111 = arith.mulf %108, %108 : vector<8x1xf32>
    %112 = arith.subf %110, %111 : vector<8x1xf32>
    %cst_52 = arith.constant 0.000000e+00 : f32
    %113 = vector.broadcast %cst_52 : f32 to vector<8x1xf32>
    %114 = arith.maximumf %112, %113 : vector<8x1xf32>
    %c1_53 = arith.constant 1 : index
    %c0_54 = arith.constant 0 : index
    %c0_55 = arith.constant 0 : index
    %115 = vector.load %arg2[%c1_53, %c0_54, %c0_55] : memref<3x8x1xf32, #tpu.memory_space<vmem>>, vector<1x8x1xf32>
    %116 = vector.shape_cast %115 : vector<1x8x1xf32> to vector<8x1xf32>
    %cst_56 = arith.constant 9.99999974E-6 : f32
    %117 = vector.broadcast %cst_56 : f32 to vector<8x1xf32>
    %118 = arith.addf %114, %117 : vector<8x1xf32>
    %119 = math.rsqrt %118 : vector<8x1xf32>
    %120 = arith.mulf %116, %119 : vector<8x1xf32>
    %c1_57 = arith.constant 1 : index
    %c0_58 = arith.constant 0 : index
    %c0_59 = arith.constant 0 : index
    %121 = vector.load %arg3[%c1_57, %c0_58, %c0_59] : memref<3x8x1xf32, #tpu.memory_space<vmem>>, vector<1x8x1xf32>
    %122 = vector.shape_cast %121 : vector<1x8x1xf32> to vector<8x1xf32>
    %123 = arith.mulf %108, %120 : vector<8x1xf32>
    %124 = arith.subf %122, %123 : vector<8x1xf32>
    %125 = vector.broadcast %120 : vector<8x1xf32> to vector<8x128xf32>
    %126 = arith.mulf %101, %125 : vector<8x128xf32>
    %127 = vector.broadcast %124 : vector<8x1xf32> to vector<8x128xf32>
    %128 = arith.addf %126, %127 : vector<8x128xf32>
    %129 = vector.extract_strided_slice %128 {offsets = [0, 0], sizes = [8, 64], strides = [1, 1]} : vector<8x128xf32> to vector<8x64xf32>
    %c0_60 = arith.constant 0 : index
    %c8 = arith.constant 8 : index
    %c0_61 = arith.constant 0 : index
    %130 = vector.load %arg4[%c0_60, %c8, %c0_61] : memref<2x32x64xf32, #tpu.memory_space<vmem>>, vector<1x8x64xf32>
    %131 = vector.shape_cast %130 : vector<1x8x64xf32> to vector<8x64xf32>
    %132 = vector.shape_cast %129 : vector<8x64xf32> to vector<1x8x64xf32>
    tpu.vector_store %arg4[%c0_60, %c8, %c0_61], %132 {strides = array<i32>} : memref<2x32x64xf32, #tpu.memory_space<vmem>>, vector<1x8x64xf32>,
    %133 = vector.extract_strided_slice %128 {offsets = [0, 64], sizes = [8, 64], strides = [1, 1]} : vector<8x128xf32> to vector<8x64xf32>
    %c1_62 = arith.constant 1 : index
    %c8_63 = arith.constant 8 : index
    %c0_64 = arith.constant 0 : index
    %134 = vector.load %arg4[%c1_62, %c8_63, %c0_64] : memref<2x32x64xf32, #tpu.memory_space<vmem>>, vector<1x8x64xf32>
    %135 = vector.shape_cast %134 : vector<1x8x64xf32> to vector<8x64xf32>
    %136 = vector.shape_cast %133 : vector<8x64xf32> to vector<1x8x64xf32>
    tpu.vector_store %arg4[%c1_62, %c8_63, %c0_64], %136 {strides = array<i32>} : memref<2x32x64xf32, #tpu.memory_space<vmem>>, vector<1x8x64xf32>,
    %137 = vector.extract_strided_slice %4 {offsets = [16, 0], sizes = [8, 128], strides = [1, 1]} : vector<32x128xf32> to vector<8x128xf32>
    %138 = arith.addf %128, %137 : vector<8x128xf32>
    %c1_i32_65 = arith.constant 1 : i32
    %139 = tpu.dynamic_rotate %138 by %c1_i32_65 dim 1 : vector<8x128xf32>, i32 -> vector<8x128xf32>
    %cst_66 = arith.constant 0.000000e+00 : f32
    %140 = vector.broadcast %cst_66 : f32 to vector<8x128xf32>
    %141 = arith.select %30, %139, %140 : vector<8x128xi1>, vector<8x128xf32>
    %c127_i32_67 = arith.constant 127 : i32
    %142 = tpu.dynamic_rotate %138 by %c127_i32_67 dim 1 : vector<8x128xf32>, i32 -> vector<8x128xf32>
    %cst_68 = arith.constant 0.000000e+00 : f32
    %143 = vector.broadcast %cst_68 : f32 to vector<8x128xf32>
    %144 = arith.select %39, %142, %143 : vector<8x128xi1>, vector<8x128xf32>
    %145 = tpu.concatenate %141, %138, %144 in 0 : vector<8x128xf32>, vector<8x128xf32>, vector<8x128xf32> -> vector<24x128xf32>
    %c2 = arith.constant 2 : index
    %c0_69 = arith.constant 0 : index
    %c0_70 = arith.constant 0 : index
    %146 = vector.load %arg1[%c2, %c0_69, %c0_70] : memref<3x8x24xf32, #tpu.memory_space<vmem>>, vector<1x8x24xf32>
    %147 = vector.shape_cast %146 : vector<1x8x24xf32> to vector<8x24xf32>
    %cst_71 = arith.constant dense<0.000000e+00> : vector<8x128xf32>
    %148 = tpu.matmul %147, %145, %cst_71 {dimension_numbers = #tpu.dot_dimension_numbers<[1], [0], [0], [1], [0, 0, 1, 1], [], []>} : vector<8x24xf32>, vector<24x128xf32>, vector<8x128xf32> -> vector<8x128xf32>
    %cst_72 = arith.constant 0.000000e+00 : f32
    %149 = vector.broadcast %cst_72 : f32 to vector<8x128xf32>
    %150 = arith.maximumf %148, %149 : vector<8x128xf32>
    %cst_73 = arith.constant dense<0.000000e+00> : vector<8xf32>
    %151 = vector.multi_reduction <add>, %150, %cst_73 [1] : vector<8x128xf32> to vector<8xf32>
    %152 = vector.shape_cast %151 : vector<8xf32> to vector<8x1xf32>
    %153 = arith.mulf %150, %150 : vector<8x128xf32>
    %cst_74 = arith.constant dense<0.000000e+00> : vector<8xf32>
    %154 = vector.multi_reduction <add>, %153, %cst_74 [1] : vector<8x128xf32> to vector<8xf32>
    %155 = vector.shape_cast %154 : vector<8xf32> to vector<8x1xf32>
    %cst_75 = arith.constant 7.812500e-03 : f32
    %156 = vector.broadcast %cst_75 : f32 to vector<8x1xf32>
    %157 = arith.mulf %152, %156 : vector<8x1xf32>
    %cst_76 = arith.constant 7.812500e-03 : f32
    %158 = vector.broadcast %cst_76 : f32 to vector<8x1xf32>
    %159 = arith.mulf %155, %158 : vector<8x1xf32>
    %160 = arith.mulf %157, %157 : vector<8x1xf32>
    %161 = arith.subf %159, %160 : vector<8x1xf32>
    %cst_77 = arith.constant 0.000000e+00 : f32
    %162 = vector.broadcast %cst_77 : f32 to vector<8x1xf32>
    %163 = arith.maximumf %161, %162 : vector<8x1xf32>
    %c2_78 = arith.constant 2 : index
    %c0_79 = arith.constant 0 : index
    %c0_80 = arith.constant 0 : index
    %164 = vector.load %arg2[%c2_78, %c0_79, %c0_80] : memref<3x8x1xf32, #tpu.memory_space<vmem>>, vector<1x8x1xf32>
    %165 = vector.shape_cast %164 : vector<1x8x1xf32> to vector<8x1xf32>
    %cst_81 = arith.constant 9.99999974E-6 : f32
    %166 = vector.broadcast %cst_81 : f32 to vector<8x1xf32>
    %167 = arith.addf %163, %166 : vector<8x1xf32>
    %168 = math.rsqrt %167 : vector<8x1xf32>
    %169 = arith.mulf %165, %168 : vector<8x1xf32>
    %c2_82 = arith.constant 2 : index
    %c0_83 = arith.constant 0 : index
    %c0_84 = arith.constant 0 : index
    %170 = vector.load %arg3[%c2_82, %c0_83, %c0_84] : memref<3x8x1xf32, #tpu.memory_space<vmem>>, vector<1x8x1xf32>
    %171 = vector.shape_cast %170 : vector<1x8x1xf32> to vector<8x1xf32>
    %172 = arith.mulf %157, %169 : vector<8x1xf32>
    %173 = arith.subf %171, %172 : vector<8x1xf32>
    %174 = vector.broadcast %169 : vector<8x1xf32> to vector<8x128xf32>
    %175 = arith.mulf %150, %174 : vector<8x128xf32>
    %176 = vector.broadcast %173 : vector<8x1xf32> to vector<8x128xf32>
    %177 = arith.addf %175, %176 : vector<8x128xf32>
    %178 = vector.extract_strided_slice %177 {offsets = [0, 0], sizes = [8, 64], strides = [1, 1]} : vector<8x128xf32> to vector<8x64xf32>
    %c0_85 = arith.constant 0 : index
    %c16 = arith.constant 16 : index
    %c0_86 = arith.constant 0 : index
    %179 = vector.load %arg4[%c0_85, %c16, %c0_86] : memref<2x32x64xf32, #tpu.memory_space<vmem>>, vector<1x8x64xf32>
    %180 = vector.shape_cast %179 : vector<1x8x64xf32> to vector<8x64xf32>
    %181 = vector.shape_cast %178 : vector<8x64xf32> to vector<1x8x64xf32>
    tpu.vector_store %arg4[%c0_85, %c16, %c0_86], %181 {strides = array<i32>} : memref<2x32x64xf32, #tpu.memory_space<vmem>>, vector<1x8x64xf32>,
    %182 = vector.extract_strided_slice %177 {offsets = [0, 64], sizes = [8, 64], strides = [1, 1]} : vector<8x128xf32> to vector<8x64xf32>
    %c1_87 = arith.constant 1 : index
    %c16_88 = arith.constant 16 : index
    %c0_89 = arith.constant 0 : index
    %183 = vector.load %arg4[%c1_87, %c16_88, %c0_89] : memref<2x32x64xf32, #tpu.memory_space<vmem>>, vector<1x8x64xf32>
    %184 = vector.shape_cast %183 : vector<1x8x64xf32> to vector<8x64xf32>
    %185 = vector.shape_cast %182 : vector<8x64xf32> to vector<1x8x64xf32>
    tpu.vector_store %arg4[%c1_87, %c16_88, %c0_89], %185 {strides = array<i32>} : memref<2x32x64xf32, #tpu.memory_space<vmem>>, vector<1x8x64xf32>,
    %c0_90 = arith.constant 0 : index
    %c24 = arith.constant 24 : index
    %c0_91 = arith.constant 0 : index
    %186 = vector.load %arg0[%c0_90, %c24, %c0_91] : memref<2x32x64xf32, #tpu.memory_space<vmem>>, vector<2x8x64xf32>
    %c0_92 = arith.constant 0 : index
    %c24_93 = arith.constant 24 : index
    %c0_94 = arith.constant 0 : index
    %187 = vector.load %arg4[%c0_92, %c24_93, %c0_94] : memref<2x32x64xf32, #tpu.memory_space<vmem>>, vector<2x8x64xf32>
    tpu.vector_store %arg4[%c0_92, %c24_93, %c0_94], %186 {strides = array<i32>} : memref<2x32x64xf32, #tpu.memory_space<vmem>>, vector<2x8x64xf32>,
    return
  }
}

</mosaic_0001>

<llo_original>
// kernel: res2conv1d_relu_bn.1
$region0: #{res2conv1d_relu_bn.1}
  #allocation0 [shape = 'u32[]', space=smem, size = 0x4, offset = 0x4, fixed_abs, tag = 'smem constant byte address 0x4 - core index']
  #allocation1 [shape = 'u32[72,128]{1,0:T(1,128)}', space=vmem, size = 0x9000, scoped, tag = 'internal scratch']
  %s0 = inlined_call_operand.vmem [shape: f32[2,32,64], index: 0, kind: input, shape index: {}]
  %s1 = inlined_call_operand.vmem [shape: f32[3,8,24], index: 1, kind: input, shape index: {}]
  %s2 = inlined_call_operand.vmem [shape: f32[3,8,1], index: 2, kind: input, shape index: {}]
  %s3 = inlined_call_operand.vmem [shape: f32[3,8,1], index: 3, kind: input, shape index: {}]
  %s4 = inlined_call_operand.hbm [shape: f32[2,32,64], index: 4, kind: output, shape index: {}]
  %s5 = sld [smem:[#allocation0]]
  $region26: #{res2conv1d_relu_bn.1} parent=0
    _
  %s7 = ssub.s32 1, %s5
  %s8 = scalar_select 0, %s7, %s5
  $region1: #{res2conv1d_relu_bn.1} parent=0
    #allocation2 [shape = 'u8[32768]{0}', space=vmem, size = 0x8000, scoped, tag = 'output window, operand 0, single buffered']
    #allocation3 [shape = 's32[1]{0}', space=sflag, size = 0x4, scoped, tag = 'scoped memory for res2conv1d_relu_bn.1']
    %9 = vsyncpa [#allocation3], 0
    // Predicated region
    $region2: #{res2conv1d_relu_bn.1} parent=1 // pred_check
      _
    $region3: #{res2conv1d_relu_bn.1} parent=1 // pred_check_branch
      %11 = sbr.rel (0) target = $region5
    $region4: #{res2conv1d_relu_bn.1} parent=1 // pred_region
      _
    $region5: #{res2conv1d_relu_bn.1} parent=1 // pred_fallthru
      _
    // Predicated region
    $region6: #{res2conv1d_relu_bn.1} parent=1 // pred_check
      _
    $region7: #{res2conv1d_relu_bn.1} parent=1 // pred_check_branch
      %13 = sbr.rel (0) target = $region9
    $region8: #{res2conv1d_relu_bn.1} parent=1 // pred_region
      _
    $region9: #{res2conv1d_relu_bn.1} parent=1 // pred_fallthru
      _
    // Predicated region
    $region10: #{res2conv1d_relu_bn.1} parent=1 // pred_check
      _
    $region11: #{res2conv1d_relu_bn.1} parent=1 // pred_check_branch
      %15 = sbr.rel (0) target = $region13
    $region12: #{res2conv1d_relu_bn.1} parent=1 // pred_region
      _
    $region13: #{res2conv1d_relu_bn.1} parent=1 // pred_fallthru
      _
    // Predicated region
    $region14: #{res2conv1d_relu_bn.1} parent=1 // pred_check
      _
    $region15: #{res2conv1d_relu_bn.1} parent=1 // pred_check_branch
      %17 = sbr.rel (0) target = $region17
    $region16: #{res2conv1d_relu_bn.1} parent=1 // pred_region
      _
    $region17: #{res2conv1d_relu_bn.1} parent=1 // pred_fallthru
      _
    %v18 = vld [vmem:[%s0] sm:$0xff]
    %v19 = vld [vmem:[%s0 + $0x8] sm:$0xff]
    %v20 = vld [vmem:[%s0 + $0x10] sm:$0xff]
    %s21 = scalar_lea.vmem %s0, 32
    %v22 = vld [vmem:[%s21] sm:$0xff]
    %v23 = vld [vmem:[%s21 + $0x8] sm:$0xff]
    %v24 = vld [vmem:[%s21 + $0x10] sm:$0xff]
    %28 = vrot.lane.b32.xlu0 %v22, 64
    %v29 = vpop.permute.xlu0 %28
    %30 = vrot.lane.b32.xlu0 %v23, 64
    %v31 = vpop.permute.xlu0 %30
    %32 = vrot.lane.b32.xlu0 %v24, 64
    %v33 = vpop.permute.xlu0 %32
    %vm37 = vcmask 523264
    %v38 = vsel %vm37, %v18, %v29
    %v39 = vsel %vm37, %v19, %v31
    %v40 = vsel %vm37, %v20, %v33
    %v41 = vlaneseq
    %v42 = vand.u32 %v41, 127
    %vm43 = vcmp.lt.s32.totalorder %v42, 0
    %v44 = vsub.s32 0, %v42
    %v45 = vsel %vm43, %v44, %v42
    %v46 = vshrl.u32 %v45, 6
    %v47 = vand.u32 %v45, 63
    %v48 = vsub.s32 0, %v47
    %v49 = vsel %vm43, %v48, %v47
    %vm50 = vcmp.ne.s32.totalorder %v49, 0
    %vm51 = vcmp.lt.s32.totalorder %v49, 0
    %vm52 = vmand %vm51, %vm50
    %v53 = vadd.s32 %v49, 64
    %v54 = vsel %vm52, %v53, %v49
    %v55 = vadd.s32 %v54, 4294967295
    %vm56 = vcmp.ge.s32.totalorder %v55, 0
    %vm57 = vcmp.lt.s32.totalorder %v55, 64
    %vm58 = vmand %vm56, %vm57
    %v59 = vadd.s32 %v54, 1
    %vm60 = vcmp.ge.s32.totalorder %v59, 0
    %vm61 = vcmp.lt.s32.totalorder %v59, 64
    %vm62 = vmand %vm60, %vm61
    %63 = vrot.lane.b32.xlu0 %v38, 1
    %v64 = vpop.permute.xlu0 %63
    %v65 = vsel %vm58, %v64, 0.0
    %66 = vrot.lane.b32.xlu0 %v38, 127
    %v67 = vpop.permute.xlu0 %66
    %v68 = vsel %vm62, %v67, 0.0
    %v69 = vld [vmem:[%s1] sm:$0xff]
    %vm70 = vcmask 195584
    %v72 = vsel %vm70, %v69, 0
    %74 = vmatpush.msra.mxu0 0.0
    %75 = vmatpush.msra.mxu0 0.0
    %76 = vmatpush.msra.mxu0 0.0
    %77 = vmatpush.msra.mxu0 0.0
    %78 = vmatpush.msra.mxu0 0.0
    %79 = vmatpush.msra.mxu0 0.0
    %80 = vmatpush.msra.mxu0 0.0
    %81 = vmatpush.msra.mxu0 0.0
    %82 = vmatpush.msra.mxu0 0.0
    %83 = vmatpush.msra.mxu0 0.0
    %84 = vmatpush.msra.mxu0 0.0
    %85 = vmatpush.msra.mxu0 0.0
    %86 = vmatpush.msra.mxu0 0.0
    %87 = vmatpush.msra.mxu0 %v68
    %88 = vmatpush.msra.mxu0 %v38
    %89 = vmatpush.msra.mxu0 %v65
    %90 = vmatmul.f32.gmra.mxu0 %v72
    %v91 = vpop.f32.mrf.mxu0
    %v92 = vadd.f32 0.0, %v91
    %93 = vdwg.mxu0
    %v94 = vmax.f32 %v92, 0.0
    %95 = vadd.xlane.f32.xlu0 %v94
    %v96 = vpop.xlane.xlu0 %95
    %v97 = vmul.f32 %v94, %v94
    %98 = vadd.xlane.f32.xlu0 %v97
    %v99 = vpop.xlane.xlu0 %98
    %v100 = vmul.f32 %v96, 0.0078125
    %v101 = vmul.f32 %v99, 0.0078125
    %v102 = vmul.f32 %v100, %v100
    %v103 = vsub.f32 %v101, %v102
    %v104 = vmax.f32 %v103, 0.0
    %v105 = vld [vmem:[%s2] sm:$0xff]
    %v106 = vadd.f32 %v104, 1e-05
    %v107 = vrsqrt.pop %v106
    %v108 = vmul.f32 %v107, %v106
    %v109 = vmul.f32 %v108, %v107
    %v110 = vmul.f32 0.5, %v109
    %v111 = vsub.f32 1.5, %v110
    %v112 = vmul.f32 %v107, %v111
    %vm113 = vweird.f32 %v106
    %vm114 = vweird.f32 %v107
    %vm115 = vmor %vm113, %vm114
    %v116 = vsel %vm115, %v107, %v112
    %v117 = vmul.f32 %v105, %v116
    %v118 = vld [vmem:[%s3] sm:$0xff]
    %v119 = vmul.f32 %v100, %v117
    %v120 = vsub.f32 %v118, %v119
    %122 = vset.pattern.permute.xlu0 0
    %123 = vperm.xlu0 %122, %v117
    %v124 = vpop.permute.xlu0 %123
    %v126 = vmul.f32 %v94, %v124
    %128 = vset.pattern.permute.xlu0 0
    %129 = vperm.xlu0 %128, %v120
    %v130 = vpop.permute.xlu0 %129
    %v132 = vadd.f32 %v126, %v130
    %133 = vst.msk [vmem:[#allocation2] sm:$0xff] %vm37, %v132
    %135 = vrot.lane.b32.xlu0 %v132, 64
    %v136 = vpop.permute.xlu0 %135
    %s138 = scalar_lea.vmem [#allocation2], 32
    %139 = vst.msk [vmem:[%s138] sm:$0xff] %vm37, %v136
    %v140 = vadd.f32 %v132, %v39
    %141 = vrot.lane.b32.xlu0 %v140, 1
    %v142 = vpop.permute.xlu0 %141
    %v143 = vsel %vm58, %v142, 0.0
    %144 = vrot.lane.b32.xlu0 %v140, 127
    %v145 = vpop.permute.xlu0 %144
    %v146 = vsel %vm62, %v145, 0.0
    %s147 = scalar_lea.vmem %s1, 8
    %v148 = vld [vmem:[%s147] sm:$0xff]
    %v150 = vsel %vm70, %v148, 0
    %152 = vmatpush.msra.mxu0 0.0
    %153 = vmatpush.msra.mxu0 0.0
    %154 = vmatpush.msra.mxu0 0.0
    %155 = vmatpush.msra.mxu0 0.0
    %156 = vmatpush.msra.mxu0 0.0
    %157 = vmatpush.msra.mxu0 0.0
    %158 = vmatpush.msra.mxu0 0.0
    %159 = vmatpush.msra.mxu0 0.0
    %160 = vmatpush.msra.mxu0 0.0
    %161 = vmatpush.msra.mxu0 0.0
    %162 = vmatpush.msra.mxu0 0.0
    %163 = vmatpush.msra.mxu0 0.0
    %164 = vmatpush.msra.mxu0 0.0
    %165 = vmatpush.msra.mxu0 %v146
    %166 = vmatpush.msra.mxu0 %v140
    %167 = vmatpush.msra.mxu0 %v143
    %168 = vmatmul.f32.gmra.mxu0 %v150
    %v169 = vpop.f32.mrf.mxu0
    %v170 = vadd.f32 0.0, %v169
    %171 = vdwg.mxu0
    %v172 = vmax.f32 %v170, 0.0
    %173 = vadd.xlane.f32.xlu0 %v172
    %v174 = vpop.xlane.xlu0 %173
    %v175 = vmul.f32 %v172, %v172
    %176 = vadd.xlane.f32.xlu0 %v175
    %v177 = vpop.xlane.xlu0 %176
    %v178 = vmul.f32 %v174, 0.0078125
    %v179 = vmul.f32 %v177, 0.0078125
    %v180 = vmul.f32 %v178, %v178
    %v181 = vsub.f32 %v179, %v180
    %v182 = vmax.f32 %v181, 0.0
    %s183 = scalar_lea.vmem %s2, 8
    %v184 = vld [vmem:[%s183] sm:$0xff]
    %v185 = vadd.f32 %v182, 1e-05
    %v186 = vrsqrt.pop %v185
    %v187 = vmul.f32 %v186, %v185
    %v188 = vmul.f32 %v187, %v186
    %v189 = vmul.f32 0.5, %v188
    %v190 = vsub.f32 1.5, %v189
    %v191 = vmul.f32 %v186, %v190
    %vm192 = vweird.f32 %v185
    %vm193 = vweird.f32 %v186
    %vm194 = vmor %vm192, %vm193
    %v195 = vsel %vm194, %v186, %v191
    %v196 = vmul.f32 %v184, %v195
    %s197 = scalar_lea.vmem %s3, 8
    %v198 = vld [vmem:[%s197] sm:$0xff]
    %v199 = vmul.f32 %v178, %v196
    %v200 = vsub.f32 %v198, %v199
    %202 = vset.pattern.permute.xlu0 0
    %203 = vperm.xlu0 %202, %v196
    %v204 = vpop.permute.xlu0 %203
    %v206 = vmul.f32 %v172, %v204
    %208 = vset.pattern.permute.xlu0 0
    %209 = vperm.xlu0 %208, %v200
    %v210 = vpop.permute.xlu0 %209
    %v212 = vadd.f32 %v206, %v210
    %213 = vst.msk [vmem:[#allocation2 + $0x8] sm:$0xff] %vm37, %v212
    %215 = vrot.lane.b32.xlu0 %v212, 64
    %v216 = vpop.permute.xlu0 %215
    %218 = vst.msk [vmem:[%s138 + $0x8] sm:$0xff] %vm37, %v216
    %v219 = vadd.f32 %v212, %v40
    %220 = vrot.lane.b32.xlu0 %v219, 1
    %v221 = vpop.permute.xlu0 %220
    %v222 = vsel %vm58, %v221, 0.0
    %223 = vrot.lane.b32.xlu0 %v219, 127
    %v224 = vpop.permute.xlu0 %223
    %v225 = vsel %vm62, %v224, 0.0
    %s226 = scalar_lea.vmem %s1, 16
    %v227 = vld [vmem:[%s226] sm:$0xff]
    %v229 = vsel %vm70, %v227, 0
    %231 = vmatpush.msra.mxu0 0.0
    %232 = vmatpush.msra.mxu0 0.0
    %233 = vmatpush.msra.mxu0 0.0
    %234 = vmatpush.msra.mxu0 0.0
    %235 = vmatpush.msra.mxu0 0.0
    %236 = vmatpush.msra.mxu0 0.0
    %237 = vmatpush.msra.mxu0 0.0
    %238 = vmatpush.msra.mxu0 0.0
    %239 = vmatpush.msra.mxu0 0.0
    %240 = vmatpush.msra.mxu0 0.0
    %241 = vmatpush.msra.mxu0 0.0
    %242 = vmatpush.msra.mxu0 0.0
    %243 = vmatpush.msra.mxu0 0.0
    %244 = vmatpush.msra.mxu0 %v225
    %245 = vmatpush.msra.mxu0 %v219
    %246 = vmatpush.msra.mxu0 %v222
    %247 = vmatmul.f32.gmra.mxu0 %v229
    %v248 = vpop.f32.mrf.mxu0
    %v249 = vadd.f32 0.0, %v248
    %250 = vdwg.mxu0
    %v251 = vmax.f32 %v249, 0.0
    %252 = vadd.xlane.f32.xlu0 %v251
    %v253 = vpop.xlane.xlu0 %252
    %v254 = vmul.f32 %v251, %v251
    %255 = vadd.xlane.f32.xlu0 %v254
    %v256 = vpop.xlane.xlu0 %255
    %v257 = vmul.f32 %v253, 0.0078125
    %v258 = vmul.f32 %v256, 0.0078125
    %v259 = vmul.f32 %v257, %v257
    %v260 = vsub.f32 %v258, %v259
    %v261 = vmax.f32 %v260, 0.0
    %s262 = scalar_lea.vmem %s2, 16
    %v263 = vld [vmem:[%s262] sm:$0xff]
    %v264 = vadd.f32 %v261, 1e-05
    %v265 = vrsqrt.pop %v264
    %v266 = vmul.f32 %v265, %v264
    %v267 = vmul.f32 %v266, %v265
    %v268 = vmul.f32 0.5, %v267
    %v269 = vsub.f32 1.5, %v268
    %v270 = vmul.f32 %v265, %v269
    %vm271 = vweird.f32 %v264
    %vm272 = vweird.f32 %v265
    %vm273 = vmor %vm271, %vm272
    %v274 = vsel %vm273, %v265, %v270
    %v275 = vmul.f32 %v263, %v274
    %s276 = scalar_lea.vmem %s3, 16
    %v277 = vld [vmem:[%s276] sm:$0xff]
    %v278 = vmul.f32 %v257, %v275
    %v279 = vsub.f32 %v277, %v278
    %281 = vset.pattern.permute.xlu0 0
    %282 = vperm.xlu0 %281, %v275
    %v283 = vpop.permute.xlu0 %282
    %v285 = vmul.f32 %v251, %v283
    %287 = vset.pattern.permute.xlu0 0
    %288 = vperm.xlu0 %287, %v279
    %v289 = vpop.permute.xlu0 %288
    %v291 = vadd.f32 %v285, %v289
    %292 = vst.msk [vmem:[#allocation2 + $0x10] sm:$0xff] %vm37, %v291
    %294 = vrot.lane.b32.xlu0 %v291, 64
    %v295 = vpop.permute.xlu0 %294
    %297 = vst.msk [vmem:[%s138 + $0x10] sm:$0xff] %vm37, %v295
    %v298 = vld [vmem:[%s0 + $0x18] sm:$0xff]
    %v299 = vld [vmem:[%s0 + $0x38] sm:$0xff]
    %300 = vst.msk [vmem:[#allocation2 + $0x18] sm:$0xff] %vm37, %v298
    %301 = vst.msk [vmem:[#allocation2 + $0x38] sm:$0xff] %vm37, %v299
    // Predicated region
    $region18: #{res2conv1d_relu_bn.1} parent=1 // pred_check
      _
    $region19: #{res2conv1d_relu_bn.1} parent=1 // pred_check_branch
      %303 = sbr.rel (0) target = $region21
    $region20: #{res2conv1d_relu_bn.1} parent=1 // pred_region
      %305 = vsyncadd [#allocation3], 0
      %s306 = sshll.u32 [#allocation2], 4
      %s307 = int_to_ptr.vmem [resolvable:$true] %s306
      %s308 = sshll.u32 %s4, 4
      %s309 = int_to_ptr.hbm [resolvable:$true] %s308
      %314 = dma.vmem_to_hbm [thread:$0]  %s307, 1024, %s309, [#allocation3], 128, 128, 8
    $region21: #{res2conv1d_relu_bn.1} parent=1 // pred_fallthru
      _
    // Predicated region
    $region22: #{res2conv1d_relu_bn.1} parent=1 // pred_check
      _
    $region23: #{res2conv1d_relu_bn.1} parent=1 // pred_check_branch
      %316 = sbr.rel (0) target = $region25
    $region24: #{res2conv1d_relu_bn.1} parent=1 // pred_region
      %318 = dma.done [#allocation3], 1024
    $region25: #{res2conv1d_relu_bn.1} parent=1 // pred_fallthru
      _
    %319 = vsyncpa [#allocation3], 1

</llo_original>
